<compile_context>
chip_gen: v7x
topology: tpu7x:2x2x1
jax: 0.10.0
libtpu: 0.0.40
codegen_flags: <defaults>
</compile_context>

<pallas_src>
import jax
import jax.numpy as jnp
from jax.experimental import pallas as pl
from jax.experimental.pallas import tpu as pltpu

EPS = 1e-10


def _cosine_head_kernel(support_ref, query_ref, out_ref):
    """support_ref: [S, R, D], query_ref: [R, D]  ->  out_ref: [S, R].

    Only the support embedding is normalized. Inputs may be bf16 or f32;
    all arithmetic is performed in f32 (safe on v5e, free on v6e/v7x).
    """
    s = support_ref[...].astype(jnp.float32)            # [S, R, D]
    x = query_ref[...].astype(jnp.float32)              # [R, D]

    sum_sq = jnp.sum(s * s, axis=-1)                     # [S, R]
    inv_mag = jax.lax.rsqrt(jnp.maximum(sum_sq, EPS))    # clamp(eps, inf).rsqrt()
    dot = jnp.sum(s * x[None, :, :], axis=-1)            # [S, R]

    out_ref[...] = (dot * inv_mag).astype(out_ref.dtype)


def distance_network(support_set: jax.Array, input_image: jax.Array) -> jax.Array:
    """Single episode. support_set: [S, B, D], input_image: [B, D] -> [B, S]."""
    S, B, D = support_set.shape
    assert input_image.shape == (B, D)

    # Gridless call: whole problem lives in VMEM, no pipeline / double-buffering.
    sims_sb = pl.pallas_call(
        _cosine_head_kernel,
        out_shape=jax.ShapeDtypeStruct((S, B), jnp.float32),
        in_specs=[
            pl.BlockSpec(memory_space=pltpu.MemorySpace.VMEM),
            pl.BlockSpec(memory_space=pltpu.MemorySpace.VMEM),
        ],
        out_specs=pl.BlockSpec(memory_space=pltpu.MemorySpace.VMEM),
    )(support_set, input_image)

    # Tiny [S,B] -> [B,S] transpose done in the XLA wrapper, not via in-kernel XLU.
    return sims_sb.T


def distance_network_batched(support_sets: jax.Array,
                             input_images: jax.Array,
                             *, rows_per_tile: int = 128) -> jax.Array:
    """Many episodes in one launch.

    support_sets: [N, S, B, D], input_images: [N, B, D]  ->  [N, B, S].
    Episodes and batch are flattened to R = N*B rows; the kernel grid tiles over
    rows (parallel across TensorCores) and writes a lane-dense [S, R] output.
    """
    N, S, B, D = support_sets.shape
    assert input_images.shape == (N, B, D)
    R = N * B

    # Wrapper-side layout plumbing (cheap XLA copies): row r = n*B + b.
    sup = jnp.transpose(support_sets, (1, 0, 2, 3)).reshape(S, R, D)   # [S, R, D]
    qry = input_images.reshape(R, D)                                   # [R, D]

    tr = rows_per_tile
    r_pad = pl.cdiv(R, tr) * tr
    if r_pad != R:
        # Zero rows are harmless: dot = 0 -> similarity = 0 (no NaNs thanks to the eps clamp).
        sup = jnp.pad(sup, ((0, 0), (0, r_pad - R), (0, 0)))
        qry = jnp.pad(qry, ((0, r_pad - R), (0, 0)))

    sims = pl.pallas_call(
        _cosine_head_kernel,
        out_shape=jax.ShapeDtypeStruct((S, r_pad), jnp.float32),
        grid=(r_pad // tr,),
        in_specs=[
            pl.BlockSpec((S, tr, D), lambda i: (0, i, 0)),
            pl.BlockSpec((tr, D), lambda i: (i, 0)),
        ],
        out_specs=pl.BlockSpec((S, tr), lambda i: (0, i)),   # lane dim = tr (multiple of 128)
        compiler_params=pltpu.CompilerParams(
            dimension_semantics=("parallel",)),
    )(sup, qry)

    sims = sims[:, :R].reshape(S, N, B)        # [S, N, B]
    return jnp.transpose(sims, (1, 2, 0))      # [N, B, S]


def _reference(support_set, input_image):
    """Pure-JAX reference mirroring the PyTorch loop (f32 math)."""
    s = support_set.astype(jnp.float32)
    x = input_image.astype(jnp.float32)
    sum_support = jnp.sum(s ** 2, axis=-1)                       # [S, B]
    mag = jax.lax.rsqrt(jnp.clip(sum_support, EPS, None))        # [S, B]
    dot = jnp.einsum("sbd,bd->sb", s, x)                         # [S, B]
    return (dot * mag).T                                         # [B, S]


if __name__ == "__main__":
    key = jax.random.PRNGKey(0)
    k1, k2, k3, k4 = jax.random.split(key, 4)

    # ---- single episode (classes_per_set=8, batch=2, embedding dim=64) ----
    S, B, D = 8, 2, 64
    support_set = jax.random.normal(k1, (S, B, D), dtype=jnp.float32)
    input_image = jax.random.normal(k2, (B, D), dtype=jnp.float32)

    out = jax.block_until_ready(distance_network(support_set, input_image))
    ref = _reference(support_set, input_image)
    assert out.shape == (B, S), out.shape
    assert jnp.allclose(out, ref, atol=1e-5, rtol=1e-5)

    # ---- batched episodes (amortizes launch overhead; lane-dense output slab) ----
    N = 100   # R = N*B = 200 rows -> padded to 256, grid=(2,), "parallel"
    support_sets = jax.random.normal(k3, (N, S, B, D), dtype=jnp.float32)
    input_images = jax.random.normal(k4, (N, B, D), dtype=jnp.float32)

    out_b = jax.block_until_ready(distance_network_batched(support_sets, input_images))
    ref_b = jax.vmap(_reference)(support_sets, input_images)     # [N, B, S]
    assert out_b.shape == (N, B, S), out_b.shape
    assert jnp.allclose(out_b, ref_b, atol=1e-5, rtol=1e-5)

    print("KERNEL_OK")
</pallas_src>

<mosaic_0001>
module attributes {stable_mosaic.version = 11 : i64} {
  func.func @_cosine_head_kernel(%arg0: memref<8x2x64xf32, #tpu.memory_space<vmem>>, %arg1: memref<2x64xf32, #tpu.memory_space<vmem>>, %arg2: memref<8x2xf32, #tpu.memory_space<vmem>>) attributes {dimension_semantics = [], scalar_prefetch = 0 : i64, scratch_operands = 0 : i64, tpu.core_type = #tpu.core_type<tc>} {
    %c0 = arith.constant 0 : index
    %c0_0 = arith.constant 0 : index
    %c0_1 = arith.constant 0 : index
    %0 = vector.load %arg0[%c0, %c0_0, %c0_1] : memref<8x2x64xf32, #tpu.memory_space<vmem>>, vector<8x2x64xf32>
    %c0_2 = arith.constant 0 : index
    %c0_3 = arith.constant 0 : index
    %1 = vector.load %arg1[%c0_2, %c0_3] : memref<2x64xf32, #tpu.memory_space<vmem>>, vector<2x64xf32>
    %2 = arith.mulf %0, %0 : vector<8x2x64xf32>
    %cst = arith.constant dense<0.000000e+00> : vector<8x2xf32>
    %3 = vector.multi_reduction <add>, %2, %cst [2] : vector<8x2x64xf32> to vector<8x2xf32>
    %cst_4 = arith.constant 1.000000e-10 : f32
    %4 = vector.broadcast %cst_4 : f32 to vector<8x2xf32>
    %5 = arith.maximumf %3, %4 : vector<8x2xf32>
    %6 = math.rsqrt %5 : vector<8x2xf32>
    %7 = vector.shape_cast %1 : vector<2x64xf32> to vector<1x2x64xf32>
    %8 = vector.broadcast %7 : vector<1x2x64xf32> to vector<8x2x64xf32>
    %9 = arith.mulf %0, %8 : vector<8x2x64xf32>
    %cst_5 = arith.constant dense<0.000000e+00> : vector<8x2xf32>
    %10 = vector.multi_reduction <add>, %9, %cst_5 [2] : vector<8x2x64xf32> to vector<8x2xf32>
    %11 = arith.mulf %10, %6 : vector<8x2xf32>
    %c0_6 = arith.constant 0 : index
    %c0_7 = arith.constant 0 : index
    %12 = vector.load %arg2[%c0_6, %c0_7] : memref<8x2xf32, #tpu.memory_space<vmem>>, vector<8x2xf32>
    tpu.vector_store %arg2[%c0_6, %c0_7], %11 {strides = array<i32>} : memref<8x2xf32, #tpu.memory_space<vmem>>, vector<8x2xf32>,
    return
  }
}

</mosaic_0001>

<llo_original>
// kernel: tpu_custom_call.1
$region0: #{tpu_custom_call.1}
  #allocation0 [shape = 'u32[]', space=smem, size = 0x4, offset = 0x4, fixed_abs, tag = 'smem constant byte address 0x4 - core index']
  #allocation1 [shape = 'u32[144,128]{1,0:T(1,128)}', space=vmem, size = 0x12000, scoped, tag = 'internal scratch']
  %s0 = inlined_call_operand.hbm [shape: f32[8,2,64], index: 0, kind: input, shape index: {}]
  %s1 = inlined_call_operand.vmem [shape: f32[2,64], index: 1, kind: input, shape index: {}]
  %s2 = inlined_call_operand.vmem [shape: f32[8,2], index: 2, kind: output, shape index: {}]
  %s3 = sld [smem:[#allocation0]]
  $region22: #{tpu_custom_call.1} parent=0
    _
  %s5 = ssub.s32 1, %s3
  %s6 = scalar_select 0, %s5, %s3
  $region1: #{tpu_custom_call.1} parent=0
    #allocation2 [shape = 'u8[8192]{0}', space=vmem, size = 0x2000, scoped, tag = 'input window, operand 0, single buffered']
    #allocation3 [shape = 's32[1]{0}', space=sflag, size = 0x4, scoped, tag = 'scoped memory for tpu_custom_call.1']
    %7 = vsyncpa [#allocation3], 0
    // Predicated region
    $region2: #{tpu_custom_call.1} parent=1 // pred_check
      _
    $region3: #{tpu_custom_call.1} parent=1 // pred_check_branch
      %9 = sbr.rel (0) target = $region5
    $region4: #{tpu_custom_call.1} parent=1 // pred_region
      %s11 = ssub.s32 256, 256
      %12 = vsyncadd [#allocation3], %s11
      %s13 = sshll.u32 [#allocation2], 4
      %s14 = int_to_ptr.vmem [resolvable:$true] %s13
      %19 = dma.hbm_to_vmem [thread:$0]  %s0, 256, %s14, [#allocation3], 32, 32, 2
    $region5: #{tpu_custom_call.1} parent=1 // pred_fallthru
      _
    // Predicated region
    $region6: #{tpu_custom_call.1} parent=1 // pred_check
      _
    $region7: #{tpu_custom_call.1} parent=1 // pred_check_branch
      %21 = sbr.rel (0) target = $region9
    $region8: #{tpu_custom_call.1} parent=1 // pred_region
      _
    $region9: #{tpu_custom_call.1} parent=1 // pred_fallthru
      _
    // Predicated region
    $region10: #{tpu_custom_call.1} parent=1 // pred_check
      _
    $region11: #{tpu_custom_call.1} parent=1 // pred_check_branch
      %23 = sbr.rel (0) target = $region13
    $region12: #{tpu_custom_call.1} parent=1 // pred_region
      %24 = dma.done [#allocation3], 256
    $region13: #{tpu_custom_call.1} parent=1 // pred_fallthru
      _
    %v25 = vld [vmem:[#allocation2] sm:$0x3]
    %v26 = vld [vmem:[#allocation2 + $0x2] sm:$0x3]
    %v27 = vld [vmem:[#allocation2 + $0x4] sm:$0x3]
    %v28 = vld [vmem:[#allocation2 + $0x6] sm:$0x3]
    %v29 = vld [vmem:[#allocation2 + $0x8] sm:$0x3]
    %v30 = vld [vmem:[#allocation2 + $0xa] sm:$0x3]
    %v31 = vld [vmem:[#allocation2 + $0xc] sm:$0x3]
    %v32 = vld [vmem:[#allocation2 + $0xe] sm:$0x3]
    %v33 = vld [vmem:[%s1] sm:$0x3]
    %v34 = vmul.f32 %v25, %v25
    %v35 = vmul.f32 %v26, %v26
    %v36 = vmul.f32 %v27, %v27
    %v37 = vmul.f32 %v28, %v28
    %v38 = vmul.f32 %v29, %v29
    %v39 = vmul.f32 %v30, %v30
    %v40 = vmul.f32 %v31, %v31
    %v41 = vmul.f32 %v32, %v32
    %vm42 = vcmask 517120
    %v43 = vsel %vm42, %v34, 0.0
    %44 = vadd.xlane.f32.xlu0 %v43
    %v45 = vpop.xlane.xlu0 %44
    %v46 = vsel %vm42, %v35, 0.0
    %47 = vadd.xlane.f32.xlu0 %v46
    %v48 = vpop.xlane.xlu0 %47
    %v49 = vsel %vm42, %v36, 0.0
    %50 = vadd.xlane.f32.xlu0 %v49
    %v51 = vpop.xlane.xlu0 %50
    %v52 = vsel %vm42, %v37, 0.0
    %53 = vadd.xlane.f32.xlu0 %v52
    %v54 = vpop.xlane.xlu0 %53
    %v55 = vsel %vm42, %v38, 0.0
    %56 = vadd.xlane.f32.xlu0 %v55
    %v57 = vpop.xlane.xlu0 %56
    %v58 = vsel %vm42, %v39, 0.0
    %59 = vadd.xlane.f32.xlu0 %v58
    %v60 = vpop.xlane.xlu0 %59
    %v61 = vsel %vm42, %v40, 0.0
    %62 = vadd.xlane.f32.xlu0 %v61
    %v63 = vpop.xlane.xlu0 %62
    %v64 = vsel %vm42, %v41, 0.0
    %65 = vadd.xlane.f32.xlu0 %v64
    %v66 = vpop.xlane.xlu0 %65
    %v67 = vmax.f32 %v45, 1e-10
    %v68 = vmax.f32 %v48, 1e-10
    %v69 = vmax.f32 %v51, 1e-10
    %v70 = vmax.f32 %v54, 1e-10
    %v71 = vmax.f32 %v57, 1e-10
    %v72 = vmax.f32 %v60, 1e-10
    %v73 = vmax.f32 %v63, 1e-10
    %v74 = vmax.f32 %v66, 1e-10
    %v75 = vrsqrt.pop %v67
    %v76 = vrsqrt.pop %v68
    %v77 = vrsqrt.pop %v69
    %v78 = vrsqrt.pop %v70
    %v79 = vrsqrt.pop %v71
    %v80 = vrsqrt.pop %v72
    %v81 = vrsqrt.pop %v73
    %v82 = vrsqrt.pop %v74
    %v83 = vmul.f32 %v25, %v33
    %v84 = vmul.f32 %v26, %v33
    %v85 = vmul.f32 %v27, %v33
    %v86 = vmul.f32 %v28, %v33
    %v87 = vmul.f32 %v29, %v33
    %v88 = vmul.f32 %v30, %v33
    %v89 = vmul.f32 %v31, %v33
    %v90 = vmul.f32 %v32, %v33
    %v91 = vsel %vm42, %v83, 0.0
    %92 = vadd.xlane.f32.xlu0 %v91
    %v93 = vpop.xlane.xlu0 %92
    %v94 = vsel %vm42, %v84, 0.0
    %95 = vadd.xlane.f32.xlu0 %v94
    %v96 = vpop.xlane.xlu0 %95
    %v97 = vsel %vm42, %v85, 0.0
    %98 = vadd.xlane.f32.xlu0 %v97
    %v99 = vpop.xlane.xlu0 %98
    %v100 = vsel %vm42, %v86, 0.0
    %101 = vadd.xlane.f32.xlu0 %v100
    %v102 = vpop.xlane.xlu0 %101
    %v103 = vsel %vm42, %v87, 0.0
    %104 = vadd.xlane.f32.xlu0 %v103
    %v105 = vpop.xlane.xlu0 %104
    %v106 = vsel %vm42, %v88, 0.0
    %107 = vadd.xlane.f32.xlu0 %v106
    %v108 = vpop.xlane.xlu0 %107
    %v109 = vsel %vm42, %v89, 0.0
    %110 = vadd.xlane.f32.xlu0 %v109
    %v111 = vpop.xlane.xlu0 %110
    %v112 = vsel %vm42, %v90, 0.0
    %113 = vadd.xlane.f32.xlu0 %v112
    %v114 = vpop.xlane.xlu0 %113
    %v115 = vmul.f32 %v93, %v75
    %v116 = vmul.f32 %v96, %v76
    %v117 = vmul.f32 %v99, %v77
    %v118 = vmul.f32 %v102, %v78
    %v119 = vmul.f32 %v105, %v79
    %v120 = vmul.f32 %v108, %v80
    %v121 = vmul.f32 %v111, %v81
    %v122 = vmul.f32 %v114, %v82
    %v131 = vlaneseq
    %v132 = vand.u32 %v131, 127
    %v133 = vlaneseq
    %v134 = vshrl.u32 %v133, 7
    %v135 = vsub.s32 %v132, %v134
    %v136 = vrot.slane %v115, %v135
    %v137 = vlaneseq
    %v138 = vshrl.u32 %v137, 7
    %v139 = vsub.s32 %v132, %v138
    %v140 = vrot.slane %v116, %v139
    %v141 = vlaneseq
    %v142 = vshrl.u32 %v141, 7
    %v143 = vsub.s32 %v132, %v142
    %v144 = vrot.slane %v117, %v143
    %v145 = vlaneseq
    %v146 = vshrl.u32 %v145, 7
    %v147 = vsub.s32 %v132, %v146
    %v148 = vrot.slane %v118, %v147
    %v149 = vlaneseq
    %v150 = vshrl.u32 %v149, 7
    %v151 = vsub.s32 %v132, %v150
    %v152 = vrot.slane %v119, %v151
    %v153 = vlaneseq
    %v154 = vshrl.u32 %v153, 7
    %v155 = vsub.s32 %v132, %v154
    %v156 = vrot.slane %v120, %v155
    %v157 = vlaneseq
    %v158 = vshrl.u32 %v157, 7
    %v159 = vsub.s32 %v132, %v158
    %v160 = vrot.slane %v121, %v159
    %v161 = vlaneseq
    %v162 = vshrl.u32 %v161, 7
    %v163 = vsub.s32 %v132, %v162
    %v164 = vrot.slane %v122, %v163
    %vm165 = vcmask 1041409
    %v166 = vsel %vm165, %v140, %v136
    %vm167 = vcmask 1042434
    %v168 = vsel %vm167, %v144, %v166
    %vm169 = vcmask 1043459
    %v170 = vsel %vm169, %v148, %v168
    %vm171 = vcmask 1044484
    %v172 = vsel %vm171, %v152, %v170
    %vm173 = vcmask 1045509
    %v174 = vsel %vm173, %v156, %v172
    %vm175 = vcmask 1046534
    %v176 = vsel %vm175, %v160, %v174
    %vm177 = vcmask 1047559
    %v178 = vsel %vm177, %v164, %v176
    %vm180 = vcmask 15360
    %181 = vst.msk [vmem:[%s2] sm:$0xff] %vm180, %v178
    // Predicated region
    $region14: #{tpu_custom_call.1} parent=1 // pred_check
      _
    $region15: #{tpu_custom_call.1} parent=1 // pred_check_branch
      %183 = sbr.rel (0) target = $region17
    $region16: #{tpu_custom_call.1} parent=1 // pred_region
      _
    $region17: #{tpu_custom_call.1} parent=1 // pred_fallthru
      _
    // Predicated region
    $region18: #{tpu_custom_call.1} parent=1 // pred_check
      _
    $region19: #{tpu_custom_call.1} parent=1 // pred_check_branch
      %185 = sbr.rel (0) target = $region21
    $region20: #{tpu_custom_call.1} parent=1 // pred_region
      _
    $region21: #{tpu_custom_call.1} parent=1 // pred_fallthru
      _
    %186 = vsyncpa [#allocation3], 1

</llo_original>
